<compile_context>
chip_gen: v5e
topology: v5e:2x2
jax: 0.10.0
libtpu: 0.0.40
codegen_flags: <defaults>
</compile_context>

<pallas_src>
import math
from functools import partial

import jax
import jax.numpy as jnp
from jax.experimental import pallas as pl
from jax.experimental.pallas import tpu as pltpu


_TEMPORAL_SIZES = (13, 32, 7, 24)          # month, day, weekday, hour  (mark columns 0..3)
_TEMPORAL_OFFSETS = (0, 13, 45, 52)        # cumulative offsets into the stacked table
_N_TEMPORAL = sum(_TEMPORAL_SIZES)         # 76
_HOT_WIDTH = 128                           # stacked table padded to one vreg lane-width


def _sinusoid_table(n, d_model):
    """Matches PyTorch FixedEmbedding / PositionalEmbedding construction (d_model even)."""
    position = jnp.arange(n, dtype=jnp.float32)[:, None]
    div_term = jnp.exp(
        jnp.arange(0, d_model, 2, dtype=jnp.float32) * -(math.log(10000.0) / d_model))
    ang = position * div_term
    tab = jnp.zeros((n, d_model), jnp.float32)
    tab = tab.at[:, 0::2].set(jnp.sin(ang))
    tab = tab.at[:, 1::2].set(jnp.cos(ang)[:, : d_model // 2])
    return tab


def build_data_embedding_params(conv_weight, d_model, seq_len, dtype=jnp.float32):
    """Builds (once, outside jit) the fused weight and the positional-embedding slab.

    conv_weight: (d_model, c_in, 3) PyTorch Conv1d weight.
    Returns:
      w_fused: (128 + 3*c_in, d_pad)  rows = [sin tables (76, zero-padded to 128); tap0; tap1; tap2]
      pe:      (seq_len, d_pad)       positional embedding, lane-dense padded
    """
    d_out, c_in, kw = conv_weight.shape
    assert d_out == d_model and kw == 3
    assert d_model % 2 == 0, "sinusoidal tables require even d_model"
    d_pad = -(-d_model // 128) * 128

    tables = jnp.concatenate([_sinusoid_table(n, d_model) for n in _TEMPORAL_SIZES], axis=0)
    tables = jnp.pad(tables, ((0, _HOT_WIDTH - _N_TEMPORAL), (0, 0)))        # (128, d_model)

    # conv taps: row k*c_in + c of w_stack == W[:, c, k]  (so  x_shift_k @ w_stack[k] == tap k)
    w_stack = jnp.transpose(conv_weight.astype(jnp.float32), (2, 1, 0)).reshape(3 * c_in, d_model)

    w_fused = jnp.concatenate([tables, w_stack], axis=0)                     # (128+3c_in, d_model)
    w_fused = jnp.pad(w_fused, ((0, 0), (0, d_pad - d_model)))

    pe = _sinusoid_table(seq_len, d_model)                                   # PositionalEmbedding.pe[:, :L]
    pe = jnp.pad(pe, ((0, 0), (0, d_pad - d_model)))

    return w_fused.astype(dtype), pe.astype(dtype)


def _choose_tile_l(L, max_tile_l):
    if L <= max_tile_l:
        return L
    for tl in range(max_tile_l - max_tile_l % 8, 7, -8):
        if L % tl == 0:
            return tl
    return L   # no suitable multiple-of-8 divisor: fall back to the full sequence


def data_embedding_kernel(xp_ref, mark_ref, w_ref, pe_ref, o_ref):
    xp = xp_ref[0]                           # (TL, 3*c_in)  pre-shifted conv taps [x_prev|x|x_next]
    mark = mark_ref[0]                       # (TL, 4) int32  [month, day, weekday, hour]
    tl = xp.shape[0]
    n_hot = w_ref.shape[0] - xp.shape[1]     # 128 (lane-aligned stacked-table width)

    # Multi-hot over the stacked temporal tables: exactly one 1 in each table's row range.
    iota = jax.lax.broadcasted_iota(jnp.int32, (tl, n_hot), 1)
    hot = ((iota == mark[:, 0:1] + _TEMPORAL_OFFSETS[0])
           | (iota == mark[:, 1:2] + _TEMPORAL_OFFSETS[1])
           | (iota == mark[:, 2:3] + _TEMPORAL_OFFSETS[2])
           | (iota == mark[:, 3:4] + _TEMPORAL_OFFSETS[3])).astype(xp.dtype)

    # Single fused MXU pass: 4 temporal lookups + all 3 circular-conv taps.
    rhs = jnp.concatenate([hot, xp], axis=-1)            # vreg-granularity lane concat
    acc = jnp.dot(rhs, w_ref[...], preferred_element_type=jnp.float32)

    o_ref[0] = (acc + pe_ref[...].astype(jnp.float32)).astype(o_ref.dtype)


@partial(jax.jit, static_argnames=("d_model", "max_tile_l"))
def data_embedding(x, x_mark, w_fused, pe, *, d_model, max_tile_l=512):
    """x: (B, L, c_in); x_mark: (B, L, 4) ints; returns (B, L, d_model) in x.dtype."""
    B, L, c_in = x.shape
    k_total, d_pad = w_fused.shape
    tl = _choose_tile_l(L, max_tile_l)
    n_l = L // tl

    # Circular conv taps packed along channels -> no halo needed when tiling the L axis.
    x_pack = jnp.concatenate(
        [jnp.roll(x, 1, axis=1), x, jnp.roll(x, -1, axis=1)], axis=-1)       # (B, L, 3*c_in)
    mark = x_mark.astype(jnp.int32)

    out = pl.pallas_call(
        data_embedding_kernel,
        out_shape=jax.ShapeDtypeStruct((B, L, d_pad), x.dtype),
        grid_spec=pltpu.PrefetchScalarGridSpec(
            num_scalar_prefetch=0,
            grid=(n_l, B),                   # batch innermost -> pe / w blocks stay resident
            in_specs=[
                pl.BlockSpec((1, tl, 3 * c_in), lambda l, b: (b, l, 0)),
                pl.BlockSpec((1, tl, 4), lambda l, b: (b, l, 0)),
                pl.BlockSpec((k_total, d_pad), lambda l, b: (0, 0)),
                pl.BlockSpec((tl, d_pad), lambda l, b: (l, 0)),
            ],
            out_specs=pl.BlockSpec((1, tl, d_pad), lambda l, b: (b, l, 0)),
        ),
        compiler_params=pltpu.CompilerParams(
            dimension_semantics=("parallel", "parallel")),
    )(x_pack, mark, w_fused, pe)

    if d_pad != d_model:
        out = out[:, :, :d_model]
    return out


def _reference(x, x_mark, conv_weight, d_model):
    """Pure-JAX reference mirroring the PyTorch forward (eval mode, dropout = identity)."""
    x_ncw = jnp.transpose(x, (0, 2, 1))
    x_padded = jnp.pad(x_ncw, ((0, 0), (0, 0), (1, 1)), mode="wrap")
    y = jax.lax.conv_general_dilated(
        x_padded, conv_weight, window_strides=(1,), padding="VALID",
        dimension_numbers=("NCH", "OIH", "NCH"))
    value = jnp.transpose(y, (0, 2, 1))                              # (B, L, d_model)
    tabs = [_sinusoid_table(n, d_model) for n in _TEMPORAL_SIZES]
    temporal = sum(jnp.take(tab, x_mark[:, :, c], axis=0) for c, tab in enumerate(tabs))
    pe = _sinusoid_table(x.shape[1], d_model)[None]                  # (1, L, d_model)
    return value + temporal + pe


if __name__ == "__main__":
    B, L, c_in, d_model = 2, 16, 4, 32

    key = jax.random.PRNGKey(0)
    k_x, k_w, k_m0, k_m1, k_m2, k_m3 = jax.random.split(key, 6)

    x = jax.random.normal(k_x, (B, L, c_in), dtype=jnp.float32)

    # x_mark columns: [month, day, weekday, hour] (freq='h')
    month = jax.random.randint(k_m0, (B, L, 1), 0, 13, dtype=jnp.int32)
    day = jax.random.randint(k_m1, (B, L, 1), 0, 32, dtype=jnp.int32)
    wday = jax.random.randint(k_m2, (B, L, 1), 0, 7, dtype=jnp.int32)
    hour = jax.random.randint(k_m3, (B, L, 1), 0, 24, dtype=jnp.int32)
    x_mark = jnp.concatenate([month, day, wday, hour], axis=-1)

    # Conv1d weight (d_model, c_in, 3), kaiming_normal fan_in / leaky_relu (a=0.01)
    fan_in = c_in * 3
    gain = math.sqrt(2.0 / (1.0 + 0.01 ** 2))
    std = gain / math.sqrt(fan_in)
    conv_weight = std * jax.random.normal(k_w, (d_model, c_in, 3), dtype=jnp.float32)

    # Build fused parameters once (outside jit), then run the fused Pallas kernel.
    w_fused, pe = build_data_embedding_params(conv_weight, d_model=d_model, seq_len=L)
    out = data_embedding(x, x_mark, w_fused, pe, d_model=d_model, max_tile_l=8)  # 2 L-tiles x 2 batches
    out = jax.block_until_ready(out)

    ref = _reference(x, x_mark, conv_weight, d_model)
    assert out.shape == (B, L, d_model)
    assert jnp.allclose(out, ref, atol=1e-4, rtol=1e-4), "mismatch vs JAX reference"

    print("KERNEL_OK")
</pallas_src>

<mosaic_0001>
module attributes {stable_mosaic.version = 11 : i64} {
  func.func @data_embedding_kernel(%arg0: i32, %arg1: i32, %arg2: memref<1x8x12xf32, #tpu.memory_space<vmem>>, %arg3: memref<1x8x4xi32, #tpu.memory_space<vmem>>, %arg4: memref<140x128xf32, #tpu.memory_space<vmem>>, %arg5: memref<8x128xf32, #tpu.memory_space<vmem>>, %arg6: memref<1x8x128xf32, #tpu.memory_space<vmem>>) attributes {dimension_semantics = [#tpu.dimension_semantics<parallel>, #tpu.dimension_semantics<parallel>], iteration_bounds = array<i64: 2, 2>, scalar_prefetch = 0 : i64, scratch_operands = 0 : i64, tpu.core_type = #tpu.core_type<tc>, window_params = [{transform_indices = @transform_0, window_bounds = array<i64: 1, 8, 12>}, {transform_indices = @transform_1, window_bounds = array<i64: 1, 8, 4>}, {pipeline_mode = #tpu.pipeline_mode<synchronous>, transform_indices = @transform_2, window_bounds = array<i64: 140, 128>}, {transform_indices = @transform_3, window_bounds = array<i64: 8, 128>}, {transform_indices = @transform_4, window_bounds = array<i64: 1, 8, 128>}]} {
    %c0 = arith.constant 0 : index
    %c0_0 = arith.constant 0 : index
    %c0_1 = arith.constant 0 : index
    %0 = vector.load %arg2[%c0, %c0_0, %c0_1] : memref<1x8x12xf32, #tpu.memory_space<vmem>>, vector<1x8x12xf32>
    %1 = vector.shape_cast %0 : vector<1x8x12xf32> to vector<8x12xf32>
    %c0_2 = arith.constant 0 : index
    %c0_3 = arith.constant 0 : index
    %c0_4 = arith.constant 0 : index
    %2 = vector.load %arg3[%c0_2, %c0_3, %c0_4] : memref<1x8x4xi32, #tpu.memory_space<vmem>>, vector<1x8x4xi32>
    %3 = vector.shape_cast %2 : vector<1x8x4xi32> to vector<8x4xi32>
    %4 = tpu.iota {dimensions = array<i32: 1>} : vector<8x128xi32>
    %5 = vector.extract_strided_slice %3 {offsets = [0, 0], sizes = [8, 1], strides = [1, 1]} : vector<8x4xi32> to vector<8x1xi32>
    %c0_i32 = arith.constant 0 : i32
    %6 = vector.broadcast %c0_i32 : i32 to vector<8x1xi32>
    %7 = arith.addi %5, %6 : vector<8x1xi32>
    %8 = vector.broadcast %7 : vector<8x1xi32> to vector<8x128xi32>
    %9 = arith.cmpi eq, %4, %8 : vector<8x128xi32>
    %10 = vector.extract_strided_slice %3 {offsets = [0, 1], sizes = [8, 1], strides = [1, 1]} : vector<8x4xi32> to vector<8x1xi32>
    %c13_i32 = arith.constant 13 : i32
    %11 = vector.broadcast %c13_i32 : i32 to vector<8x1xi32>
    %12 = arith.addi %10, %11 : vector<8x1xi32>
    %13 = vector.broadcast %12 : vector<8x1xi32> to vector<8x128xi32>
    %14 = arith.cmpi eq, %4, %13 : vector<8x128xi32>
    %15 = arith.ori %9, %14 : vector<8x128xi1>
    %16 = vector.extract_strided_slice %3 {offsets = [0, 2], sizes = [8, 1], strides = [1, 1]} : vector<8x4xi32> to vector<8x1xi32>
    %c45_i32 = arith.constant 45 : i32
    %17 = vector.broadcast %c45_i32 : i32 to vector<8x1xi32>
    %18 = arith.addi %16, %17 : vector<8x1xi32>
    %19 = vector.broadcast %18 : vector<8x1xi32> to vector<8x128xi32>
    %20 = arith.cmpi eq, %4, %19 : vector<8x128xi32>
    %21 = arith.ori %15, %20 : vector<8x128xi1>
    %22 = vector.extract_strided_slice %3 {offsets = [0, 3], sizes = [8, 1], strides = [1, 1]} : vector<8x4xi32> to vector<8x1xi32>
    %c52_i32 = arith.constant 52 : i32
    %23 = vector.broadcast %c52_i32 : i32 to vector<8x1xi32>
    %24 = arith.addi %22, %23 : vector<8x1xi32>
    %25 = vector.broadcast %24 : vector<8x1xi32> to vector<8x128xi32>
    %26 = arith.cmpi eq, %4, %25 : vector<8x128xi32>
    %27 = arith.ori %21, %26 : vector<8x128xi1>
    %28 = arith.extui %27 : vector<8x128xi1> to vector<8x128xi32>
    %29 = arith.sitofp %28 : vector<8x128xi32> to vector<8x128xf32>
    %30 = tpu.concatenate %29, %1 in 1 : vector<8x128xf32>, vector<8x12xf32> -> vector<8x140xf32>
    %c0_5 = arith.constant 0 : index
    %c0_6 = arith.constant 0 : index
    %31 = vector.load %arg4[%c0_5, %c0_6] : memref<140x128xf32, #tpu.memory_space<vmem>>, vector<140x128xf32>
    %cst = arith.constant dense<0.000000e+00> : vector<8x128xf32>
    %32 = tpu.matmul %30, %31, %cst {dimension_numbers = #tpu.dot_dimension_numbers<[1], [0], [0], [1], [0, 0, 1, 1], [], []>} : vector<8x140xf32>, vector<140x128xf32>, vector<8x128xf32> -> vector<8x128xf32>
    %c0_7 = arith.constant 0 : index
    %c0_8 = arith.constant 0 : index
    %33 = vector.load %arg5[%c0_7, %c0_8] : memref<8x128xf32, #tpu.memory_space<vmem>>, vector<8x128xf32>
    %34 = arith.addf %32, %33 : vector<8x128xf32>
    %c0_9 = arith.constant 0 : index
    %c0_10 = arith.constant 0 : index
    %c0_11 = arith.constant 0 : index
    %35 = vector.load %arg6[%c0_9, %c0_10, %c0_11] : memref<1x8x128xf32, #tpu.memory_space<vmem>>, vector<1x8x128xf32>
    %36 = vector.shape_cast %35 : vector<1x8x128xf32> to vector<8x128xf32>
    %37 = vector.shape_cast %34 : vector<8x128xf32> to vector<1x8x128xf32>
    tpu.vector_store %arg6[%c0_9, %c0_10, %c0_11], %37 {strides = array<i32>} : memref<1x8x128xf32, #tpu.memory_space<vmem>>, vector<1x8x128xf32>,
    return
  }
  func.func @transform_0(%arg0: i32, %arg1: i32) -> (i32, i32, i32) {
    %c0_i32 = arith.constant 0 : i32
    %c0_i32_0 = arith.constant 0 : i32
    return %arg1, %arg0, %c0_i32 : i32, i32, i32
  }
  func.func @transform_1(%arg0: i32, %arg1: i32) -> (i32, i32, i32) {
    %c0_i32 = arith.constant 0 : i32
    %c0_i32_0 = arith.constant 0 : i32
    return %arg1, %arg0, %c0_i32 : i32, i32, i32
  }
  func.func @transform_2(%arg0: i32, %arg1: i32) -> (i32, i32) {
    %c0_i32 = arith.constant 0 : i32
    %c0_i32_0 = arith.constant 0 : i32
    %c0_i32_1 = arith.constant 0 : i32
    return %c0_i32, %c0_i32_0 : i32, i32
  }
  func.func @transform_3(%arg0: i32, %arg1: i32) -> (i32, i32) {
    %c0_i32 = arith.constant 0 : i32
    %c0_i32_0 = arith.constant 0 : i32
    return %arg0, %c0_i32 : i32, i32
  }
  func.func @transform_4(%arg0: i32, %arg1: i32) -> (i32, i32, i32) {
    %c0_i32 = arith.constant 0 : i32
    %c0_i32_0 = arith.constant 0 : i32
    return %arg1, %arg0, %c0_i32 : i32, i32, i32
  }
}

</mosaic_0001>

<llo_original>
// kernel: data_embedding.1
$region0: #{data_embedding.1}
  #allocation0 [shape = 'u32[]', space=smem, size = 0x4, offset = 0x4, fixed_abs, tag = 'smem constant byte address 0x4 - core index']
  #allocation1 [shape = 'u32[72,128]{1,0:T(1,128)}', space=vmem, size = 0x9000, scoped, tag = 'internal scratch']
  %s0 = inlined_call_operand.vmem [shape: f32[2,16,12], index: 0, kind: input, shape index: {}]
  %s1 = inlined_call_operand.vmem [shape: s32[2,16,4], index: 1, kind: input, shape index: {}]
  %s2 = inlined_call_operand.vmem [shape: f32[140,128], index: 2, kind: input, shape index: {}]
  %s3 = inlined_call_operand.vmem [shape: f32[16,128], index: 3, kind: input, shape index: {}]
  %s4 = inlined_call_operand.hbm [shape: f32[2,16,128], index: 4, kind: output, shape index: {}]
  %s5 = sld [smem:[#allocation0]]
  $region49: #{data_embedding.1} parent=0
    _
  %s7 = ssub.s32 1, %s5
  %s8 = scalar_select 0, %s7, %s5
  $region1: #{data_embedding.1} parent=0
    #allocation2 [shape = 'u8[8192]{0}', space=vmem, size = 0x2000, scoped, tag = 'output window, operand 0']
    #allocation3 [shape = 's32[2]{0}', space=sflag, size = 0x8, scoped, tag = 'scoped memory for data_embedding.1']
    %9 = vsyncpa [#allocation3], 0
    %s10 = scalar_lea.sflag [#allocation3], 1
    %11 = vsyncpa %s10, 0
    loop: start=0, step=1, limit=6
    $region2: #{data_embedding.1} parent=1 // loop_pre_header
      _
    $region3: #{data_embedding.1} parent=1 // loop_header
      %s13 = sphi 0, %s17
      %p14 = scmp.ge.s32.totalorder %s13, 6
      %s20 = sphi 0, %s32
      %s21 = sphi 0, %s28
      %s22 = sphi 0, %s20
      %s23 = sphi 0, %s21
      %s24 = sphi 0, %s22
      %s25 = sphi 0, %s23
      %s37 = sphi 0, %s39
      %s40 = sphi 0, %s37
      %s41 = sphi 0, %s40
      %s57 = sphi 0, %s41
      %s65 = sphi 0, %s67
      %s68 = sphi 0, %s65
      %s69 = sphi 0, %s68
      %s85 = sphi 0, %s69
      %s89 = sphi 0, %s89
      %s91 = sphi 0, %s89
      %s92 = sphi 0, %s91
      %s106 = sphi 0, %s92
      %s112 = sphi 0, %s114
      %s115 = sphi 0, %s112
      %s116 = sphi 0, %s115
      %s132 = sphi 0, %s116
      %s140 = sphi 0, %s142
      %s143 = sphi 0, %s140
      %s144 = sphi 0, %s143
      %s160 = sphi 0, %s144
    $region4: #{data_embedding.1} parent=1 // loop_header_branch
      %16 = sbr.rel (%p14) target = $region8
    $region5: #{data_embedding.1} parent=1 // loop_body
      %s18 = ssub.s32 %s13, 1
      %s19 = ssub.s32 %s13, 2
      %s26 = sadd.s32 1, %s21
      %p27 = scmp.ge.s32.totalorder %s26, 2
      %s28 = scalar_select %p27, 0, %s26
      %s29 = sadd.s32 1, %s20
      %s30 = scalar_select %p27, %s29, %s20
      %p31 = scmp.ge.s32.totalorder %s30, 2
      %s32 = scalar_select %p31, 0, %s30
      %s33 = ssub.s32 %s21, %s28
      %s34 = ssub.s32 %s20, %s32
      %s35 = sor.u32 %s33, %s34
      %p36 = scmp.eq.s32.totalorder %s35, 0
      %s38 = sadd.s32 %s37, 1
      %s39 = scalar_select %p36, %s37, %s38
      %p42 = pneg %p36
      %p43 = scmp.eq.s32.totalorder %s13, 3
      %p44 = por %p42, %p43
      %p45 = scmp.ne.s32.totalorder %s37, %s40
      %p46 = scmp.eq.s32.totalorder %s13, 0
      %p47 = por %p45, %p46
      %p48 = scmp.ne.s32.totalorder %s37, %s40
      %p49 = scmp.eq.s32.totalorder %s18, 3
      %p50 = por %p48, %p49
      %p51 = scmp.ne.s32.totalorder %s40, %s41
      %p52 = scmp.eq.s32.totalorder %s18, 0
      %p53 = por %p51, %p52
      %p54 = scmp.ne.s32.totalorder %s40, %s41
      %p55 = scmp.eq.s32.totalorder %s19, 3
      %p56 = por %p54, %p55
      %p58 = scmp.ne.s32.totalorder %s41, %s57
      %p59 = scmp.eq.s32.totalorder %s19, 0
      %p60 = por %p58, %p59
      %s61 = ssub.s32 %s21, %s28
      %s62 = ssub.s32 %s20, %s32
      %s63 = sor.u32 %s61, %s62
      %p64 = scmp.eq.s32.totalorder %s63, 0
      %s66 = sadd.s32 %s65, 1
      %s67 = scalar_select %p64, %s65, %s66
      %p70 = pneg %p64
      %p71 = scmp.eq.s32.totalorder %s13, 3
      %p72 = por %p70, %p71
      %p73 = scmp.ne.s32.totalorder %s65, %s68
      %p74 = scmp.eq.s32.totalorder %s13, 0
      %p75 = por %p73, %p74
      %p76 = scmp.ne.s32.totalorder %s65, %s68
      %p77 = scmp.eq.s32.totalorder %s18, 3
      %p78 = por %p76, %p77
      %p79 = scmp.ne.s32.totalorder %s68, %s69
      %p80 = scmp.eq.s32.totalorder %s18, 0
      %p81 = por %p79, %p80
      %p82 = scmp.ne.s32.totalorder %s68, %s69
      %p83 = scmp.eq.s32.totalorder %s19, 3
      %p84 = por %p82, %p83
      %p86 = scmp.ne.s32.totalorder %s69, %s85
      %p87 = scmp.eq.s32.totalorder %s19, 0
      %p88 = por %p86, %p87
      %s90 = sadd.s32 %s89, 1
      %p93 = scmp.eq.s32.totalorder %s13, 3
      %p94 = scmp.ne.s32.totalorder %s89, %s91
      %p95 = scmp.eq.s32.totalorder %s13, 0
      %p96 = por %p94, %p95
      %p97 = scmp.ne.s32.totalorder %s89, %s91
      %p98 = scmp.eq.s32.totalorder %s18, 3
      %p99 = por %p97, %p98
      %p100 = scmp.ne.s32.totalorder %s91, %s92
      %p101 = scmp.eq.s32.totalorder %s18, 0
      %p102 = por %p100, %p101
      %p103 = scmp.ne.s32.totalorder %s91, %s92
      %p104 = scmp.eq.s32.totalorder %s19, 3
      %p105 = por %p103, %p104
      %p107 = scmp.ne.s32.totalorder %s92, %s106
      %p108 = scmp.eq.s32.totalorder %s19, 0
      %p109 = por %p107, %p108
      %s110 = ssub.s32 %s20, %s32
      %p111 = scmp.eq.s32.totalorder %s110, 0
      %s113 = sadd.s32 %s112, 1
      %s114 = scalar_select %p111, %s112, %s113
      %p117 = pneg %p111
      %p118 = scmp.eq.s32.totalorder %s13, 3
      %p119 = por %p117, %p118
      %p120 = scmp.ne.s32.totalorder %s112, %s115
      %p121 = scmp.eq.s32.totalorder %s13, 0
      %p122 = por %p120, %p121
      %p123 = scmp.ne.s32.totalorder %s112, %s115
      %p124 = scmp.eq.s32.totalorder %s18, 3
      %p125 = por %p123, %p124
      %p126 = scmp.ne.s32.totalorder %s115, %s116
      %p127 = scmp.eq.s32.totalorder %s18, 0
      %p128 = por %p126, %p127
      %p129 = scmp.ne.s32.totalorder %s115, %s116
      %p130 = scmp.eq.s32.totalorder %s19, 3
      %p131 = por %p129, %p130
      %p133 = scmp.ne.s32.totalorder %s116, %s132
      %p134 = scmp.eq.s32.totalorder %s19, 0
      %p135 = por %p133, %p134
      %s136 = ssub.s32 %s21, %s28
      %s137 = ssub.s32 %s20, %s32
      %s138 = sor.u32 %s136, %s137
      %p139 = scmp.eq.s32.totalorder %s138, 0
      %s141 = sadd.s32 %s140, 1
      %s142 = scalar_select %p139, %s140, %s141
      %p145 = pneg %p139
      %p146 = scmp.eq.s32.totalorder %s13, 3
      %p147 = por %p145, %p146
      %p148 = scmp.ne.s32.totalorder %s140, %s143
      %p149 = scmp.eq.s32.totalorder %s13, 0
      %p150 = por %p148, %p149
      %p151 = scmp.ne.s32.totalorder %s140, %s143
      %p152 = scmp.eq.s32.totalorder %s18, 3
      %p153 = por %p151, %p152
      %p154 = scmp.ne.s32.totalorder %s143, %s144
      %p155 = scmp.eq.s32.totalorder %s18, 0
      %p156 = por %p154, %p155
      %p157 = scmp.ne.s32.totalorder %s143, %s144
      %p158 = scmp.eq.s32.totalorder %s19, 3
      %p159 = por %p157, %p158
      %p161 = scmp.ne.s32.totalorder %s144, %s160
      %p162 = scmp.eq.s32.totalorder %s19, 0
      %p163 = por %p161, %p162
      %p164 = scmp.le.s32.totalorder 1, %s13
      %p165 = scmp.lt.s32.totalorder %s13, 5
      %p166 = pnand %p164, %p165
      %p167 = pneg %p166
      // Predicated region
      $region9: #{data_embedding.1} parent=5 // pred_check
        _
      $region10: #{data_embedding.1} parent=5 // pred_check_branch
        %169 = sbr.rel (%p166) target = $region12
      $region11: #{data_embedding.1} parent=5 // pred_region
        %s170 = ssub.s32 %s13, 1
        // Predicated region
        $region13: #{data_embedding.1} parent=11 // pred_check
          %p171 = pneg %p102
        $region14: #{data_embedding.1} parent=11 // pred_check_branch
          %173 = sbr.rel (%p171) target = $region16
        $region15: #{data_embedding.1} parent=11 // pred_region
          _
        $region16: #{data_embedding.1} parent=11 // pred_fallthru
          _
      $region12: #{data_embedding.1} parent=5 // pred_fallthru
        _
      %p174 = scmp.lt.s32.totalorder %s13, 4
      // Predicated region
      $region17: #{data_embedding.1} parent=5 // pred_check
        %p175 = pneg %p174
      $region18: #{data_embedding.1} parent=5 // pred_check_branch
        %177 = sbr.rel (%p175) target = $region20
      $region19: #{data_embedding.1} parent=5 // pred_region
        // Predicated region
        $region21: #{data_embedding.1} parent=19 // pred_check
          %p178 = pneg %p47
        $region22: #{data_embedding.1} parent=19 // pred_check_branch
          %180 = sbr.rel (%p178) target = $region24
        $region23: #{data_embedding.1} parent=19 // pred_region
          %p181 = scmp.lt.s32.totalorder %s21, 1
          %s182 = scalar_select %p181, %s21, 1
          %p183 = scmp.lt.s32.totalorder %s20, 1
          %s184 = scalar_select %p183, %s20, 1
          %s185 = smul.addr %s182, 2
          %s186 = sadd.s32 %s184, %s185
          %s187 = smul.addr %s186, 8
          %s188 = scalar_lea.vmem %s0, %s187
        $region24: #{data_embedding.1} parent=19 // pred_fallthru
          _
        // Predicated region
        $region25: #{data_embedding.1} parent=19 // pred_check
          %p189 = pneg %p75
        $region26: #{data_embedding.1} parent=19 // pred_check_branch
          %191 = sbr.rel (%p189) target = $region28
        $region27: #{data_embedding.1} parent=19 // pred_region
          %p192 = scmp.lt.s32.totalorder %s21, 1
          %s193 = scalar_select %p192, %s21, 1
          %p194 = scmp.lt.s32.totalorder %s20, 1
          %s195 = scalar_select %p194, %s20, 1
          %s196 = smul.addr %s193, 2
          %s197 = sadd.s32 %s195, %s196
          %s198 = smul.addr %s197, 8
          %s199 = scalar_lea.vmem %s1, %s198
        $region28: #{data_embedding.1} parent=19 // pred_fallthru
          _
        // Predicated region
        $region29: #{data_embedding.1} parent=19 // pred_check
          %p200 = pneg %p122
        $region30: #{data_embedding.1} parent=19 // pred_check_branch
          %202 = sbr.rel (%p200) target = $region32
        $region31: #{data_embedding.1} parent=19 // pred_region
          %p203 = scmp.lt.s32.totalorder %s20, 1
          %s204 = scalar_select %p203, %s20, 1
          %s205 = smul.addr %s204, 8
          %s206 = scalar_lea.vmem %s3, %s205
        $region32: #{data_embedding.1} parent=19 // pred_fallthru
          _
      $region20: #{data_embedding.1} parent=5 // pred_fallthru
        _
      %p207 = scmp.le.s32.totalorder 1, %s13
      %p208 = scmp.lt.s32.totalorder %s13, 5
      %p209 = pnand %p207, %p208
      %p210 = pneg %p209
      // Predicated region
      $region33: #{data_embedding.1} parent=5 // pred_check
        _
      $region34: #{data_embedding.1} parent=5 // pred_check_branch
        %212 = sbr.rel (%p209) target = $region36
      $region35: #{data_embedding.1} parent=5 // pred_region
        %s213 = ssub.s32 %s13, 1
        %p214 = scmp.lt.s32.totalorder %s23, 1
        %s215 = scalar_select %p214, %s23, 1
        %p216 = scmp.lt.s32.totalorder %s22, 1
        %s217 = scalar_select %p216, %s22, 1
        %s218 = smul.addr %s215, 2
        %s219 = sadd.s32 %s217, %s218
        %s220 = smul.addr %s219, 8
        %s221 = scalar_lea.vmem %s0, %s220
        %p222 = pneg %p53
        %p223 = pneg %p50
        %p224 = scmp.lt.s32.totalorder %s23, 1
        %s225 = scalar_select %p224, %s23, 1
        %p226 = scmp.lt.s32.totalorder %s22, 1
        %s227 = scalar_select %p226, %s22, 1
        %s228 = smul.addr %s225, 2
        %s229 = sadd.s32 %s227, %s228
        %s230 = smul.addr %s229, 8
        %s231 = scalar_lea.vmem %s1, %s230
        %p232 = pneg %p81
        %p233 = pneg %p78
        %p234 = pneg %p102
        %p235 = pneg %p99
        %p236 = scmp.lt.s32.totalorder %s22, 1
        %s237 = scalar_select %p236, %s22, 1
        %s238 = smul.addr %s237, 8
        %s239 = scalar_lea.vmem %s3, %s238
        %p240 = pneg %p128
        %p241 = pneg %p125
        %p242 = pneg %p156
        %p243 = pneg %p153
        %s244 = sand.u32 %s143, 1
        %s245 = scalar_lea.sflag [#allocation3], %s244
        %s246 = sand.u32 %s143, 1
        %s247 = smul.addr %s246, 8
        %s248 = scalar_lea.vmem [#allocation2], %s247
        %p249 = scmp.lt.s32.totalorder %s23, 1
        %s250 = scalar_select %p249, %s23, 1
        %p251 = scmp.lt.s32.totalorder %s22, 1
        %s252 = scalar_select %p251, %s22, 1
        %s253 = smul.addr %s250, 2
        %s254 = sadd.s32 %s252, %s253
        %s255 = smul.addr %s254, 8
        %s256 = scalar_lea.vmem %s0, %s255
        %p257 = scmp.lt.s32.totalorder %s23, 1
        %s258 = scalar_select %p257, %s23, 1
        %p259 = scmp.lt.s32.totalorder %s22, 1
        %s260 = scalar_select %p259, %s22, 1
        %s261 = smul.addr %s258, 2
        %s262 = sadd.s32 %s260, %s261
        %s263 = smul.addr %s262, 8
        %s264 = scalar_lea.vmem %s1, %s263
        %p265 = scmp.lt.s32.totalorder %s22, 1
        %s266 = scalar_select %p265, %s22, 1
        %s267 = smul.addr %s266, 8
        %s268 = scalar_lea.vmem %s3, %s267
        %v269 = vld [vmem:[%s256] sm:$0xff]
        %v270 = vld [vmem:[%s264] sm:$0xff]
        %v271 = vlaneseq
        %v272 = vand.u32 %v271, 127
        %273 = vset.pattern.permute.xlu0 0
        %274 = vperm.xlu0 %273, %v270
        %v275 = vpop.permute.xlu0 %274
        %vm276 = vcmp.eq.s32.totalorder %v272, %v275
        %v277 = vadd.s32 %v270, 13
        %278 = vset.pattern.permute.xlu0 1
        %279 = vperm.xlu0 %278, %v277
        %v280 = vpop.permute.xlu0 %279
        %vm281 = vcmp.eq.s32.totalorder %v272, %v280
        %vm282 = vmor %vm276, %vm281
        %v283 = vadd.s32 %v270, 45
        %284 = vset.pattern.permute.xlu0 2
        %285 = vperm.xlu0 %284, %v283
        %v286 = vpop.permute.xlu0 %285
        %vm287 = vcmp.eq.s32.totalorder %v272, %v286
        %vm288 = vmor %vm282, %vm287
        %v289 = vadd.s32 %v270, 52
        %290 = vset.pattern.permute.xlu0 3
        %291 = vperm.xlu0 %290, %v289
        %v292 = vpop.permute.xlu0 %291
        %vm293 = vcmp.eq.s32.totalorder %v272, %v292
        %vm294 = vmor %vm288, %vm293
        %v295 = vsel %vm294, 1, 0
        %v296 = vcvt.s32.f32 %v295
        %v297 = vld [vmem:[%s2] sm:$0xff]
        %v298 = vld [vmem:[%s2 + $0x8] sm:$0xff]
        %v299 = vld [vmem:[%s2 + $0x10] sm:$0xff]
        %v300 = vld [vmem:[%s2 + $0x18] sm:$0xff]
        %v301 = vld [vmem:[%s2 + $0x20] sm:$0xff]
        %v302 = vld [vmem:[%s2 + $0x28] sm:$0xff]
        %v303 = vld [vmem:[%s2 + $0x30] sm:$0xff]
        %v304 = vld [vmem:[%s2 + $0x38] sm:$0xff]
        %v305 = vld [vmem:[%s2 + $0x40] sm:$0xff]
        %v306 = vld [vmem:[%s2 + $0x48] sm:$0xff]
        %v307 = vld [vmem:[%s2 + $0x50] sm:$0xff]
        %v308 = vld [vmem:[%s2 + $0x58] sm:$0xff]
        %v309 = vld [vmem:[%s2 + $0x60] sm:$0xff]
        %v310 = vld [vmem:[%s2 + $0x68] sm:$0xff]
        %v311 = vld [vmem:[%s2 + $0x70] sm:$0xff]
        %v312 = vld [vmem:[%s2 + $0x78] sm:$0xff]
        %v313 = vld [vmem:[%s2 + $0x80] sm:$0xff]
        %v314 = vld [vmem:[%s2 + $0x88] sm:$0xf]
        %v315 = vld [vmem:[%s268] sm:$0xff]
        %vm316 = vcmask 97280
        %v318 = vsel %vm316, %v269, 0
        %vm320 = vcmask 1043456
        %v322 = vsel %vm320, %v314, 0
        %324 = vmatpush.msra.mxu0 %v312
        %325 = vmatpush.msra.mxu0 %v311
        %326 = vmatpush.msra.mxu0 %v310
        %327 = vmatpush.msra.mxu0 %v309
        %328 = vmatpush.msra.mxu0 %v308
        %329 = vmatpush.msra.mxu0 %v307
        %330 = vmatpush.msra.mxu0 %v306
        %331 = vmatpush.msra.mxu0 %v305
        %332 = vmatpush.msra.mxu0 %v304
        %333 = vmatpush.msra.mxu0 %v303
        %334 = vmatpush.msra.mxu0 %v302
        %335 = vmatpush.msra.mxu0 %v301
        %336 = vmatpush.msra.mxu0 %v300
        %337 = vmatpush.msra.mxu0 %v299
        %338 = vmatpush.msra.mxu0 %v298
        %339 = vmatpush.msra.mxu0 %v297
        %340 = vmatmul.f32.gmra.mxu0 %v296
        %v341 = vpop.f32.mrf.mxu0
        %v342 = vadd.f32 %v315, %v341
        %343 = vdwg.mxu0
        %344 = vmatpush.msra.mxu0 0.0
        %345 = vmatpush.msra.mxu0 0.0
        %346 = vmatpush.msra.mxu0 0.0
        %347 = vmatpush.msra.mxu0 0.0
        %348 = vmatpush.msra.mxu0 0.0
        %349 = vmatpush.msra.mxu0 0.0
        %350 = vmatpush.msra.mxu0 0.0
        %351 = vmatpush.msra.mxu0 0.0
        %352 = vmatpush.msra.mxu0 0.0
        %353 = vmatpush.msra.mxu0 0.0
        %354 = vmatpush.msra.mxu0 0.0
        %355 = vmatpush.msra.mxu0 0.0
        %356 = vmatpush.msra.mxu0 0.0
        %357 = vmatpush.msra.mxu0 0.0
        %358 = vmatpush.msra.mxu0 %v322
        %359 = vmatpush.msra.mxu0 %v313
        %360 = vmatmul.f32.gmra.mxu0 %v318
        %v361 = vpop.f32.mrf.mxu0
        %v362 = vadd.f32 %v342, %v361
        %363 = vdwg.mxu0
        %364 = vst [vmem:[%s248] sm:$0xff] %v362
        %s365 = sand.u32 %s143, 1
        %s366 = scalar_lea.sflag [#allocation3], %s365
        %s367 = sand.u32 %s143, 1
        %s368 = smul.addr %s367, 8
        %s369 = scalar_lea.vmem [#allocation2], %s368
        // Predicated region
        $region37: #{data_embedding.1} parent=35 // pred_check
          %p370 = pneg %p153
        $region38: #{data_embedding.1} parent=35 // pred_check_branch
          %372 = sbr.rel (%p370) target = $region40
        $region39: #{data_embedding.1} parent=35 // pred_region
          %374 = vsyncadd %s366, 0
          %s375 = smul.addr %s23, 2
          %s376 = sadd.s32 %s22, %s375
          %s377 = smul.addr %s376, 8
          %s378 = scalar_lea.hbm %s4, %s377
          %s380 = sshll.u32 %s369, 4
          %s381 = int_to_ptr.vmem [resolvable:$true] %s380
          %s382 = sshll.u32 %s378, 4
          %s383 = int_to_ptr.hbm [resolvable:$true] %s382
          %385 = dma.vmem_to_hbm [thread:$0]  %s381, 128, %s383, %s366
        $region40: #{data_embedding.1} parent=35 // pred_fallthru
          _
      $region36: #{data_embedding.1} parent=5 // pred_fallthru
        _
      %p386 = scmp.le.s32.totalorder 2, %s13
      // Predicated region
      $region41: #{data_embedding.1} parent=5 // pred_check
        %p387 = pneg %p386
      $region42: #{data_embedding.1} parent=5 // pred_check_branch
        %389 = sbr.rel (%p387) target = $region44
      $region43: #{data_embedding.1} parent=5 // pred_region
        %s390 = ssub.s32 %s13, 2
        // Predicated region
        $region45: #{data_embedding.1} parent=43 // pred_check
          %p391 = pneg %p159
        $region46: #{data_embedding.1} parent=43 // pred_check_branch
          %393 = sbr.rel (%p391) target = $region48
        $region47: #{data_embedding.1} parent=43 // pred_region
          %s394 = sand.u32 %s144, 1
          %s395 = scalar_lea.sflag [#allocation3], %s394
          %s396 = sand.u32 %s144, 1
          %s397 = smul.addr %s396, 8
          %s398 = scalar_lea.vmem [#allocation2], %s397
          %400 = dma.done %s395, 128
        $region48: #{data_embedding.1} parent=43 // pred_fallthru
          _
      $region44: #{data_embedding.1} parent=5 // pred_fallthru
        _
    $region6: #{data_embedding.1} parent=1 // loop_footer
      %s17 = sadd.s32 1, %s13
    $region7: #{data_embedding.1} parent=1 // loop_footer_branch
      %12 = sbr.rel target = $region3
    $region8: #{data_embedding.1} parent=1 // loop_exit
      _
    %401 = vsyncpa [#allocation3], 1
    %s402 = scalar_lea.sflag [#allocation3], 1
    %403 = vsyncpa %s402, 1

</llo_original>
